<compile_context>
chip_gen: v7x
topology: tpu7x:2x2x1
jax: 0.10.0
libtpu: 0.0.40
codegen_flags: <defaults>
</compile_context>

<pallas_src>
import jax
import jax.numpy as jnp
from jax.experimental import pallas as pl
from jax.experimental.pallas import tpu as pltpu


def _snake_kernel(p_ref, x_ref, o_ref):
    # p_ref: (2,) f32 in SMEM -> [a, 1/a]  (reciprocal hoisted to the wrapper)
    # x_ref / o_ref: (rt, lane) tiles in VMEM
    a = p_ref[0]
    inv_a = p_ref[1]
    x = x_ref[...].astype(jnp.float32)          # no-op for f32, upcast for bf16
    s = jnp.sin(a * x)                          # TODO(synk): if VALU-bound on v7x, swap in a shorter sin approximation
    o_ref[...] = (x + (s * s) * inv_a).astype(o_ref.dtype)


def _largest_divisor_leq(n, cap):
    """Largest divisor of n that is <= cap (cap is small, trace-time loop)."""
    cap = max(1, min(cap, n))
    for d in range(cap, 0, -1):
        if n % d == 0:
            return d
    return 1


def _pick_lane(total, sub, max_lane):
    """Largest lane (multiple of 128, <= max_lane) dividing `total`.
    Prefer lanes whose row count is a multiple of the sublane packing `sub`
    so the row axis can be tiled with a multi-step grid."""
    cands = [l for l in range(max_lane, 127, -128) if total % l == 0]
    for l in cands:
        if (total // l) % sub == 0:
            return l, False
    if cands:
        return cands[0], False
    return 128, True  # no 128-aligned factorization -> padding fallback


def learned_snake(x, a, *, max_lane=512, max_tile_bytes=2 * 1024 * 1024, min_grid=8):
    """x: arbitrary-shaped float tensor (e.g. NCHW), a: learned scalar, shape (1,)."""
    orig_shape = x.shape
    dtype = x.dtype
    total = int(x.size)
    itemsize = jnp.dtype(dtype).itemsize
    sub = {4: 8, 2: 16, 1: 32}.get(itemsize, 8)   # sublane packing granularity

    lane, needs_pad = _pick_lane(total, sub, max_lane)

    xf = x.reshape(-1)
    if needs_pad:
        # TODO(synk): handle the ragged tail with an in-kernel masked store
        # instead of padding (rare: only when total is not 128-aligned).
        rows = pl.cdiv(pl.cdiv(total, lane), sub) * sub
        padded = rows * lane
        xf = jnp.pad(xf, (0, padded - total))
    else:
        rows = total // lane
        padded = total
    x2d = xf.reshape(rows, lane)

    # Row-tile selection: divisor of `rows`, multiple of `sub`, <= ~2 MiB tile,
    # and small enough that the grid has >= min_grid steps when possible.
    max_rt = max(sub, (max_tile_bytes // (lane * itemsize)) // sub * sub)
    if rows <= max_rt and rows % sub != 0:
        # Tiny, oddly-sized row count: single full-extent block (legal because
        # the block dim equals the full array dim), no padding needed.
        rt = rows
    elif rows % sub == 0:
        rows_s = rows // sub
        target = min(min_grid, rows_s)
        cap = max(1, min(max_rt // sub, rows_s // target))
        rt = _largest_divisor_leq(rows_s, cap) * sub
    else:
        # Rare: large row count not a multiple of `sub`; use a cdiv grid and
        # rely on Pallas masking of the partial trailing block.
        target = min(min_grid, pl.cdiv(rows, sub))
        rt = max(sub, min(max_rt, (rows // target) // sub * sub))
    grid = (pl.cdiv(rows, rt),)

    # Scalars in SMEM: [a, 1/a]; compute is always f32 in the kernel.
    a_flat = jnp.asarray(a, jnp.float32).reshape(1)
    params = jnp.concatenate([a_flat, 1.0 / a_flat])

    out2d = pl.pallas_call(
        _snake_kernel,
        out_shape=jax.ShapeDtypeStruct((rows, lane), dtype),
        grid_spec=pltpu.PrefetchScalarGridSpec(
            num_scalar_prefetch=0,
            grid=grid,
            in_specs=[
                pl.BlockSpec(memory_space=pltpu.MemorySpace.SMEM),  # [a, 1/a]
                pl.BlockSpec((rt, lane), lambda i: (i, 0)),         # x tile
            ],
            out_specs=pl.BlockSpec((rt, lane), lambda i: (i, 0)),
        ),
        compiler_params=pltpu.CompilerParams(
            dimension_semantics=("parallel",),
            # <= 2 MiB tiles, double-buffered in+out ~= 8 MiB live:
            # safe within 32 MiB scoped VMEM on v5e/v6e and on v7x (64 MiB phys).
            vmem_limit_bytes=32 * 1024 * 1024,
        ),
    )(params, x2d)

    out = out2d.reshape(-1)
    if padded != total:
        out = out[:total]
    return out.reshape(orig_shape)


def learned_snake_ref(x, a):
    # pure-JAX reference (mirrors the PyTorch forward exactly)
    return x + jnp.square(jnp.sin(a * x)) / a


if __name__ == "__main__":
    key = jax.random.PRNGKey(0)
    kx, ka = jax.random.split(key)

    # shapes consistent with an NCHW activation input
    x = jax.random.normal(kx, (2, 4, 16, 16), dtype=jnp.float32)
    # deterministic init of the learned scalar (torch.randn(1) analogue)
    a = jax.random.normal(ka, (1,), dtype=jnp.float32)

    y = learned_snake(x, a)
    y = jax.block_until_ready(y)

    y_ref = learned_snake_ref(x, a[0])
    assert y.shape == x.shape and y.dtype == x.dtype
    assert jnp.allclose(y, y_ref, atol=1e-5, rtol=1e-5), "mismatch vs reference"

    print("KERNEL_OK")
</pallas_src>

<mosaic_0001>
module attributes {stable_mosaic.version = 11 : i64} {
  func.func @_snake_kernel(%arg0: i32, %arg1: memref<2xf32, #tpu.memory_space<smem>>, %arg2: memref<8x256xf32, #tpu.memory_space<vmem>>, %arg3: memref<8x256xf32, #tpu.memory_space<vmem>>) attributes {dimension_semantics = [#tpu.dimension_semantics<parallel>], iteration_bounds = array<i64: 1>, scalar_prefetch = 0 : i64, scratch_operands = 0 : i64, tpu.core_type = #tpu.core_type<tc>, window_params = [{transform_indices = @transform_0, window_bounds = array<i64: 2>}, {transform_indices = @transform_1, window_bounds = array<i64: 8, 256>}, {transform_indices = @transform_2, window_bounds = array<i64: 8, 256>}]} {
    %c0 = arith.constant 0 : index
    %0 = memref.load %arg1[%c0] : memref<2xf32, #tpu.memory_space<smem>>
    %c1 = arith.constant 1 : index
    %1 = memref.load %arg1[%c1] : memref<2xf32, #tpu.memory_space<smem>>
    %c0_0 = arith.constant 0 : index
    %c0_1 = arith.constant 0 : index
    %2 = vector.load %arg2[%c0_0, %c0_1] : memref<8x256xf32, #tpu.memory_space<vmem>>, vector<8x256xf32>
    %3 = vector.broadcast %0 : f32 to vector<8x256xf32>
    %4 = arith.mulf %3, %2 : vector<8x256xf32>
    %5 = math.sin %4 : vector<8x256xf32>
    %6 = arith.mulf %5, %5 : vector<8x256xf32>
    %7 = vector.broadcast %1 : f32 to vector<8x256xf32>
    %8 = arith.mulf %6, %7 : vector<8x256xf32>
    %9 = arith.addf %2, %8 : vector<8x256xf32>
    %c0_2 = arith.constant 0 : index
    %c0_3 = arith.constant 0 : index
    %10 = vector.load %arg3[%c0_2, %c0_3] : memref<8x256xf32, #tpu.memory_space<vmem>>, vector<8x256xf32>
    tpu.vector_store %arg3[%c0_2, %c0_3], %9 {strides = array<i32>} : memref<8x256xf32, #tpu.memory_space<vmem>>, vector<8x256xf32>,
    return
  }
  func.func @transform_0(%arg0: i32) -> i32 {
    %c0_i32 = arith.constant 0 : i32
    %c0_i32_0 = arith.constant 0 : i32
    return %c0_i32 : i32
  }
  func.func @transform_1(%arg0: i32) -> (i32, i32) {
    %c0_i32 = arith.constant 0 : i32
    %c0_i32_0 = arith.constant 0 : i32
    return %arg0, %c0_i32 : i32, i32
  }
  func.func @transform_2(%arg0: i32) -> (i32, i32) {
    %c0_i32 = arith.constant 0 : i32
    %c0_i32_0 = arith.constant 0 : i32
    return %arg0, %c0_i32 : i32, i32
  }
}

</mosaic_0001>

<llo_original>
// kernel: tpu_custom_call.1
$region0: #{tpu_custom_call.1}
  #allocation0 [shape = 'u32[]', space=smem, size = 0x4, offset = 0x4, fixed_abs, tag = 'smem constant byte address 0x4 - core index']
  #allocation1 [shape = 'u32[144,128]{1,0:T(1,128)}', space=vmem, size = 0x12000, scoped, tag = 'internal scratch']
  %s0 = inlined_call_operand.hbm [shape: f32[2], index: 0, kind: input, shape index: {}]
  %s1 = inlined_call_operand.hbm [shape: f32[8,256], index: 1, kind: input, shape index: {}]
  %s2 = inlined_call_operand.hbm [shape: f32[8,256], index: 2, kind: output, shape index: {}]
  %s3 = sld [smem:[#allocation0]]
  $region26: #{tpu_custom_call.1} parent=0
    _
  %s5 = ssub.s32 1, %s3
  %s6 = scalar_select 0, %s5, %s3
  $region1: #{tpu_custom_call.1} parent=0
    #allocation2 [shape = 'u8[512]{0}', space=smem, size = 0x200, scoped, tag = 'input window, operand 0, single buffered']
    #allocation3 [shape = 's32[1]{0}', space=sflag, size = 0x4, scoped, tag = 'scoped memory for tpu_custom_call.1']
    #allocation4 [shape = 's32[1]{0}', space=sflag, size = 0x4, scoped, tag = 'scoped memory for tpu_custom_call.1']
    #allocation5 [shape = 's32[1]{0}', space=sflag, size = 0x4, scoped, tag = 'scoped memory for tpu_custom_call.1']
    #allocation6 [shape = 'u8[8192]{0}', space=vmem, size = 0x2000, scoped, tag = 'input window, operand 1, single buffered']
    #allocation7 [shape = 'u8[8192]{0}', space=vmem, size = 0x2000, scoped, tag = 'output window, operand 0, single buffered']
    %7 = vsyncpa [#allocation5], 0
    %8 = vsyncpa [#allocation3], 0
    %9 = vsyncpa [#allocation4], 0
    // Predicated region
    $region2: #{tpu_custom_call.1} parent=1 // pred_check
      _
    $region3: #{tpu_custom_call.1} parent=1 // pred_check_branch
      %11 = sbr.rel (0) target = $region5
    $region4: #{tpu_custom_call.1} parent=1 // pred_region
      %s13 = ssub.s32 16, 16
      %14 = vsyncadd [#allocation5], %s13
      %17 = dma.hbm_to_smem %s0, 16, [#allocation2], [#allocation5]
    $region5: #{tpu_custom_call.1} parent=1 // pred_fallthru
      _
    // Predicated region
    $region6: #{tpu_custom_call.1} parent=1 // pred_check
      _
    $region7: #{tpu_custom_call.1} parent=1 // pred_check_branch
      %19 = sbr.rel (0) target = $region9
    $region8: #{tpu_custom_call.1} parent=1 // pred_region
      %s21 = ssub.s32 256, 256
      %22 = vsyncadd [#allocation3], %s21
      %s24 = sshll.u32 [#allocation6], 4
      %s25 = int_to_ptr.vmem [resolvable:$true] %s24
      %27 = dma.hbm_to_vmem [thread:$0]  %s1, 256, %s25, [#allocation3]
    $region9: #{tpu_custom_call.1} parent=1 // pred_fallthru
      _
    // Predicated region
    $region10: #{tpu_custom_call.1} parent=1 // pred_check
      _
    $region11: #{tpu_custom_call.1} parent=1 // pred_check_branch
      %29 = sbr.rel (0) target = $region13
    $region12: #{tpu_custom_call.1} parent=1 // pred_region
      %30 = dma.done [#allocation5], 16
    $region13: #{tpu_custom_call.1} parent=1 // pred_fallthru
      _
    // Predicated region
    $region14: #{tpu_custom_call.1} parent=1 // pred_check
      _
    $region15: #{tpu_custom_call.1} parent=1 // pred_check_branch
      %32 = sbr.rel (0) target = $region17
    $region16: #{tpu_custom_call.1} parent=1 // pred_region
      %33 = dma.done [#allocation3], 256
    $region17: #{tpu_custom_call.1} parent=1 // pred_fallthru
      _
    %34 = sfence
    %s35 = sld [smem:[#allocation2]]
    %s36 = sld [smem:[#allocation2 + $0x1]]
    %v37 = vld [vmem:[#allocation6] sm:$0xff]
    %v38 = vld [vmem:[#allocation6 + $0x8] sm:$0xff]
    %v39 = vstv %s35
    %v40 = vmul.f32 %v39, %v37
    %v41 = vmul.f32 %v39, %v38
    %v42 = vand.u32 2147483647, %v40
    %vm43 = vcmp.le.f32.partialorder %v42, 0.7853982
    %vm44 = vcmp.lt.s32.totalorder %v40, 0
    %v45 = vand.u32 %v40, 2139095040
    %v46 = vshrl.u32 %v45, 23
    %v47 = vsub.s32 %v46, 127
    %v48 = vand.u32 2147483647, %v40
    %v49 = vand.u32 %v48, 8388607
    %v50 = vor.u32 %v49, 8388608
    %v51 = vsub.s32 0, %v50
    %v52 = vadd.s32 %v47, 1
    %vm53 = vcmp.gt.s32.totalorder %v52, 0
    %v54 = vsel %vm53, %v52, 0
    %v55 = vshrl.u32 %v54, 5
    %v56 = vand.u32 %v54, 31
    %v57 = vsub.s32 32, %v56
    %v58 = vshrl.u32 683565275, %v57
    %v59 = vshll.u32 683565275, %v56
    %v60 = vshrl.u32 2475754826, %v57
    %v61 = vor.u32 %v59, %v60
    %v62 = vshll.u32 2475754826, %v56
    %v63 = vshrl.u32 2131351028, %v57
    %v64 = vor.u32 %v62, %v63
    %v65 = vshll.u32 2131351028, %v56
    %v66 = vshrl.u32 2102212464, %v57
    %v67 = vor.u32 %v65, %v66
    %v68 = vshll.u32 2102212464, %v56
    %v69 = vshrl.u32 920167782, %v57
    %v70 = vor.u32 %v68, %v69
    %v71 = vshll.u32 920167782, %v56
    %v72 = vshrl.u32 1326507024, %v57
    %v73 = vor.u32 %v71, %v72
    %vm74 = vcmp.lt.s32.totalorder %v55, 1
    %vm75 = vcmp.lt.s32.totalorder %v55, 2
    %vm76 = vcmp.lt.s32.totalorder %v55, 3
    %vm77 = vcmp.lt.s32.totalorder %v55, 4
    %v78 = vsel %vm74, %v58, %v61
    %v79 = vsel %vm77, %v67, 2102212464
    %v80 = vsel %vm76, %v64, %v79
    %v81 = vsel %vm75, %v78, %v80
    %v82 = vsel %vm74, %v61, %v64
    %v83 = vsel %vm77, %v70, 920167782
    %v84 = vsel %vm76, %v67, %v83
    %v85 = vsel %vm75, %v82, %v84
    %v86 = vsel %vm74, %v64, %v67
    %v87 = vsel %vm77, %v73, 1326507024
    %v88 = vsel %vm76, %v70, %v87
    %v89 = vsel %vm75, %v86, %v88
    %v90 = vshll.u32 %v50, 8
    %v91 = vmul.u32.u64.compose %v90, %v89
    %v92 = vextract.low.u32 %v91
    %v93 = vextract.high.u32 %v91
    %v94 = vmul.u32.u64.compose %v90, %v85
    %v95 = vextract.low.u32 %v94
    %v96 = vextract.high.u32 %v94
    %v97 = vmul.u32 %v90, %v81
    %v98 = vadd.s32 %v93, %v95
    %vm99 = vc.u32 %v93, %v95
    %v100 = vadd.s32 %v96, 1
    %v101 = vsel %vm99, %v100, %v96
    %v102 = vadd.s32 %v97, %v101
    %v103 = vadd.s32 %v102, 536870912
    %v104 = vshrl.u32 %v103, 30
    %v105 = vshll.u32 %v104, 30
    %v106 = vsub.s32 %v102, %v105
    %vm107 = vcmp.lt.s32.totalorder %v106, 0
    %v108 = vsub.s32 0, %v106
    %v109 = vsel %vm107, %v108, %v106
    %v110 = vclz %v109
    %v111 = vsub.s32 %v110, 2
    %vm112 = vcmp.gt.s32.totalorder 0, %v111
    %v113 = vsel %vm112, 0, %v111
    %v114 = vsub.s32 32, %v113
    %v115 = vshll.u32 %v106, %v113
    %v116 = vshrl.u32 %v98, %v114
    %v117 = vor.u32 %v115, %v116
    %v118 = vsub.s32 4294967266, %v113
    %v119 = vadd.s32 %v118, 127
    %v120 = vshll.u32 %v119, 23
    %v121 = vor.u32 4788187, %v120
    %v122 = vand.u32 2147483647, %v121
    %v124 = vcvt.s32.f32 %v117
    %v125 = vmul.f32 %v124, %v122
    %v126 = vxor.u32 %v125, 2147483648
    %v127 = vsel %vm44, %v126, %v125
    %v128 = vsub.s32 4, %v104
    %v129 = vsel %vm44, %v128, %v104
    %v130 = vsel %vm43, %v40, %v127
    %v131 = vsel %vm43, 0, %v129
    %v132 = vcosq.f32.pop %v130
    %v133 = vsinq.f32.pop %v130
    %vm134 = vweird.f32 %v40
    %v135 = vadd.s32 %v131, 3
    %v136 = vand.u32 %v135, 3
    %vm137 = vcmp.lt.s32.totalorder %v136, 2
    %vm138 = vcmp.eq.s32.totalorder %v136, 0
    %v139 = vxor.u32 %v133, 2147483648
    %v140 = vsel %vm138, %v132, %v139
    %vm141 = vcmp.eq.s32.totalorder %v136, 2
    %v142 = vxor.u32 %v132, 2147483648
    %v143 = vsel %vm141, %v142, %v133
    %v144 = vsel %vm137, %v140, %v143
    %v145 = vsel %vm134, nan, %v144
    %v146 = vand.u32 2147483647, %v41
    %vm147 = vcmp.le.f32.partialorder %v146, 0.7853982
    %vm148 = vcmp.lt.s32.totalorder %v41, 0
    %v149 = vand.u32 %v41, 2139095040
    %v150 = vshrl.u32 %v149, 23
    %v151 = vsub.s32 %v150, 127
    %v152 = vand.u32 2147483647, %v41
    %v153 = vand.u32 %v152, 8388607
    %v154 = vor.u32 %v153, 8388608
    %v155 = vsub.s32 0, %v154
    %v156 = vadd.s32 %v151, 1
    %vm157 = vcmp.gt.s32.totalorder %v156, 0
    %v158 = vsel %vm157, %v156, 0
    %v159 = vshrl.u32 %v158, 5
    %v160 = vand.u32 %v158, 31
    %v161 = vsub.s32 32, %v160
    %v162 = vshrl.u32 683565275, %v161
    %v163 = vshll.u32 683565275, %v160
    %v164 = vshrl.u32 2475754826, %v161
    %v165 = vor.u32 %v163, %v164
    %v166 = vshll.u32 2475754826, %v160
    %v167 = vshrl.u32 2131351028, %v161
    %v168 = vor.u32 %v166, %v167
    %v169 = vshll.u32 2131351028, %v160
    %v170 = vshrl.u32 2102212464, %v161
    %v171 = vor.u32 %v169, %v170
    %v172 = vshll.u32 2102212464, %v160
    %v173 = vshrl.u32 920167782, %v161
    %v174 = vor.u32 %v172, %v173
    %v175 = vshll.u32 920167782, %v160
    %v176 = vshrl.u32 1326507024, %v161
    %v177 = vor.u32 %v175, %v176
    %vm178 = vcmp.lt.s32.totalorder %v159, 1
    %vm179 = vcmp.lt.s32.totalorder %v159, 2
    %vm180 = vcmp.lt.s32.totalorder %v159, 3
    %vm181 = vcmp.lt.s32.totalorder %v159, 4
    %v182 = vsel %vm178, %v162, %v165
    %v183 = vsel %vm181, %v171, 2102212464
    %v184 = vsel %vm180, %v168, %v183
    %v185 = vsel %vm179, %v182, %v184
    %v186 = vsel %vm178, %v165, %v168
    %v187 = vsel %vm181, %v174, 920167782
    %v188 = vsel %vm180, %v171, %v187
    %v189 = vsel %vm179, %v186, %v188
    %v190 = vsel %vm178, %v168, %v171
    %v191 = vsel %vm181, %v177, 1326507024
    %v192 = vsel %vm180, %v174, %v191
    %v193 = vsel %vm179, %v190, %v192
    %v194 = vshll.u32 %v154, 8
    %v195 = vmul.u32.u64.compose %v194, %v193
    %v196 = vextract.low.u32 %v195
    %v197 = vextract.high.u32 %v195
    %v198 = vmul.u32.u64.compose %v194, %v189
    %v199 = vextract.low.u32 %v198
    %v200 = vextract.high.u32 %v198
    %v201 = vmul.u32 %v194, %v185
    %v202 = vadd.s32 %v197, %v199
    %vm203 = vc.u32 %v197, %v199
    %v204 = vadd.s32 %v200, 1
    %v205 = vsel %vm203, %v204, %v200
    %v206 = vadd.s32 %v201, %v205
    %v207 = vadd.s32 %v206, 536870912
    %v208 = vshrl.u32 %v207, 30
    %v209 = vshll.u32 %v208, 30
    %v210 = vsub.s32 %v206, %v209
    %vm211 = vcmp.lt.s32.totalorder %v210, 0
    %v212 = vsub.s32 0, %v210
    %v213 = vsel %vm211, %v212, %v210
    %v214 = vclz %v213
    %v215 = vsub.s32 %v214, 2
    %vm216 = vcmp.gt.s32.totalorder 0, %v215
    %v217 = vsel %vm216, 0, %v215
    %v218 = vsub.s32 32, %v217
    %v219 = vshll.u32 %v210, %v217
    %v220 = vshrl.u32 %v202, %v218
    %v221 = vor.u32 %v219, %v220
    %v222 = vsub.s32 4294967266, %v217
    %v223 = vadd.s32 %v222, 127
    %v224 = vshll.u32 %v223, 23
    %v225 = vor.u32 4788187, %v224
    %v226 = vand.u32 2147483647, %v225
    %v228 = vcvt.s32.f32 %v221
    %v229 = vmul.f32 %v228, %v226
    %v230 = vxor.u32 %v229, 2147483648
    %v231 = vsel %vm148, %v230, %v229
    %v232 = vsub.s32 4, %v208
    %v233 = vsel %vm148, %v232, %v208
    %v234 = vsel %vm147, %v41, %v231
    %v235 = vsel %vm147, 0, %v233
    %v236 = vcosq.f32.pop %v234
    %v237 = vsinq.f32.pop %v234
    %vm238 = vweird.f32 %v41
    %v239 = vadd.s32 %v235, 3
    %v240 = vand.u32 %v239, 3
    %vm241 = vcmp.lt.s32.totalorder %v240, 2
    %vm242 = vcmp.eq.s32.totalorder %v240, 0
    %v243 = vxor.u32 %v237, 2147483648
    %v244 = vsel %vm242, %v236, %v243
    %vm245 = vcmp.eq.s32.totalorder %v240, 2
    %v246 = vxor.u32 %v236, 2147483648
    %v247 = vsel %vm245, %v246, %v237
    %v248 = vsel %vm241, %v244, %v247
    %v249 = vsel %vm238, nan, %v248
    %v250 = vmul.f32 %v145, %v145
    %v251 = vmul.f32 %v249, %v249
    %v252 = vstv %s36
    %v253 = vmul.f32 %v250, %v252
    %v254 = vmul.f32 %v251, %v252
    %v255 = vadd.f32 %v37, %v253
    %v256 = vadd.f32 %v38, %v254
    %257 = vst [vmem:[#allocation7] sm:$0xff] %v255
    %258 = vst [vmem:[#allocation7 + $0x8] sm:$0xff] %v256
    // Predicated region
    $region18: #{tpu_custom_call.1} parent=1 // pred_check
      _
    $region19: #{tpu_custom_call.1} parent=1 // pred_check_branch
      %260 = sbr.rel (0) target = $region21
    $region20: #{tpu_custom_call.1} parent=1 // pred_region
      %s262 = ssub.s32 256, 256
      %263 = vsyncadd [#allocation4], %s262
      %s265 = sshll.u32 [#allocation7], 4
      %s266 = int_to_ptr.vmem [resolvable:$true] %s265
      %268 = dma.vmem_to_hbm [thread:$0]  %s266, 256, %s2, [#allocation4]
    $region21: #{tpu_custom_call.1} parent=1 // pred_fallthru
      _
    // Predicated region
    $region22: #{tpu_custom_call.1} parent=1 // pred_check
      _
    $region23: #{tpu_custom_call.1} parent=1 // pred_check_branch
      %270 = sbr.rel (0) target = $region25
    $region24: #{tpu_custom_call.1} parent=1 // pred_region
      %271 = dma.done [#allocation4], 256
    $region25: #{tpu_custom_call.1} parent=1 // pred_fallthru
      _
    %272 = vsyncpa [#allocation3], 1
    %273 = vsyncpa [#allocation4], 1
    %274 = vsyncpa [#allocation5], 1

</llo_original>
